<compile_context>
chip_gen: v6e
topology: v6e:2x2x1
jax: 0.10.0
libtpu: 0.0.40
codegen_flags: <defaults>
</compile_context>

<pallas_src>
import functools

import jax
import jax.numpy as jnp
from jax.experimental import pallas as pl
from jax.experimental.pallas import tpu as pltpu


def _round_up(x, m):
    return (x + m - 1) // m * m


def _vmem_capacity_bytes():
    """Physical VMEM per TensorCore (v5e/v6e: 128 MiB, v7x: 64 MiB)."""
    try:
        return int(pltpu.get_tpu_info().vmem_capacity_bytes)
    except Exception:
        return 64 * 1024 * 1024  # conservative fallback (v7x size)


def _linear_kernel(x_ref, w_ref, b_ref, o_ref, *, precision):
    # One (tm, tn) output slab per grid step: full-K matmul with the bias folded
    # directly into the single output write.
    if precision is None:
        acc = jnp.dot(x_ref[...], w_ref[...], preferred_element_type=jnp.float32)
    else:
        acc = jnp.dot(
            x_ref[...], w_ref[...],
            preferred_element_type=jnp.float32, precision=precision,
        )
    o_ref[...] = (acc + b_ref[...]).astype(o_ref.dtype)


def encoder_forward(x, w_t, b, *, compute_dtype=None, precision=None, tm_cap=512):
    """y = x @ w_t + b  (nn.Linear forward) as a single-pass Pallas kernel.

    x   : (B, D_in)
    w_t : (D_in, D_out)   -- PyTorch weight transposed
    b   : (D_out,) or (1, D_out)
    """
    B, Din = x.shape
    Dout = w_t.shape[1]
    out_dtype = x.dtype

    if compute_dtype is not None:
        x = x.astype(compute_dtype)
        w_t = w_t.astype(compute_dtype)

    b2 = b.reshape(1, Dout).astype(jnp.float32)

    # --- lane-dense output: pad latent dim to a multiple of 128 (param-side only) ---
    Dout_p = _round_up(max(Dout, 128), 128)
    if Dout_p != Dout:
        w_t = jnp.pad(w_t, ((0, 0), (0, Dout_p - Dout)))
        b2 = jnp.pad(b2, ((0, 0), (0, Dout_p - Dout)))

    xb = jnp.dtype(x.dtype).itemsize
    wb = jnp.dtype(w_t.dtype).itemsize
    ob = jnp.dtype(out_dtype).itemsize

    cap = _vmem_capacity_bytes()
    budget = int(cap * 0.80)  # leave headroom for Mosaic internal scratch

    # --- N tiling: keep the weight resident if it fits, otherwise tile Dout.
    # Factor 2x everywhere: Pallas allocates double buffers for every input block. ---
    wgt_budget = int(budget * 0.6)
    if 2 * Din * Dout_p * wb <= wgt_budget:
        tn = Dout_p
    else:
        tn = max(128, (wgt_budget // (2 * Din * wb)) // 128 * 128)
        tn = min(tn, Dout_p)

    # --- M tiling: biggest tm (multiple of 8) whose double-buffered x/y tiles fit the
    # remaining budget; never much larger than the batch itself. ---
    rem = budget - 2 * Din * tn * wb - 2 * tn * 4
    per_row = 2 * (Din * xb + tn * ob)
    tm_fit = max(8, (rem // per_row) // 8 * 8) if rem > per_row * 8 else 8
    tm = max(8, min(tm_cap, _round_up(B, 8), tm_fit))

    n_n = pl.cdiv(Dout_p, tn)
    n_m = pl.cdiv(B, tm)
    # v7x has 2 TensorCores sharded over parallel grid axes: ensure >= 2 grid steps
    # whenever the batch allows splitting.
    if n_n * n_m < 2 and B > 8:
        tm = max(8, _round_up(pl.cdiv(B, 2), 8))
        n_m = pl.cdiv(B, tm)

    # N outer, M inner: the weight block index is constant across the M sweep, so it is
    # fetched from HBM exactly once per N tile and stays resident in VMEM.
    grid = (n_n, n_m)

    needed = (
        2 * tm * Din * xb      # double-buffered x tiles
        + 2 * Din * tn * wb    # weight tile (double-buffered allocation)
        + 2 * tn * 4           # bias (f32)
        + 2 * tm * tn * ob     # double-buffered output tiles
    )
    vmem_limit = int(min(int(cap * 0.85),
                         max(needed + needed // 4, 32 * 1024 * 1024)))

    cost = pl.CostEstimate(
        flops=2 * B * Din * Dout_p,
        transcendentals=0,
        bytes_accessed=B * Din * xb + Din * Dout_p * wb + Dout_p * 4 + B * Dout_p * ob,
    )

    kernel = functools.partial(_linear_kernel, precision=precision)

    y = pl.pallas_call(
        kernel,
        out_shape=jax.ShapeDtypeStruct((B, Dout_p), out_dtype),
        grid_spec=pltpu.PrefetchScalarGridSpec(
            num_scalar_prefetch=0,
            grid=grid,
            in_specs=[
                pl.BlockSpec((tm, Din), lambda j, i: (i, 0)),   # x rows (streamed)
                pl.BlockSpec((Din, tn), lambda j, i: (0, j)),   # weight (resident per N tile)
                pl.BlockSpec((1, tn), lambda j, i: (0, j)),     # bias
            ],
            out_specs=pl.BlockSpec((tm, tn), lambda j, i: (i, j)),
        ),
        compiler_params=pltpu.CompilerParams(
            dimension_semantics=("parallel", "parallel"),
            vmem_limit_bytes=vmem_limit,
        ),
        cost_estimate=cost,
    )(x, w_t, b2)

    if Dout_p != Dout:
        y = y[:, :Dout]
    return y


if __name__ == "__main__":
    key = jax.random.PRNGKey(0)

    # --- Test 1: Encoder(input_shape=256, latent_dim=128), batch NOT a multiple of 8
    # (exercises the pad-free partial-tile path). ---
    batch, input_shape, latent_dim = 6, 256, 128
    kx, kw, kb = jax.random.split(key, 3)
    bound = 1.0 / (input_shape ** 0.5)
    weight = jax.random.uniform(
        kw, (latent_dim, input_shape), jnp.float32, minval=-bound, maxval=bound
    )  # PyTorch layout: (out, in)
    bias = jax.random.uniform(kb, (latent_dim,), jnp.float32, minval=-bound, maxval=bound)
    x = jax.random.normal(kx, (batch, input_shape), jnp.float32)

    y = jax.block_until_ready(encoder_forward(x, weight.T, bias))
    y_ref = x @ weight.T + bias
    assert y.shape == (batch, latent_dim)
    assert jnp.allclose(y, y_ref, atol=1e-4, rtol=1e-4)

    # --- Test 2: latent_dim not a multiple of 128 + batch > 8 (exercises the Dout
    # lane-padding path and the >=2 parallel grid steps nudge). ---
    batch2, latent_dim2 = 10, 72
    kx2, kw2, kb2 = jax.random.split(jax.random.PRNGKey(1), 3)
    weight2 = jax.random.uniform(
        kw2, (latent_dim2, input_shape), jnp.float32, minval=-bound, maxval=bound
    )
    bias2 = jax.random.uniform(kb2, (latent_dim2,), jnp.float32, minval=-bound, maxval=bound)
    x2 = jax.random.normal(kx2, (batch2, input_shape), jnp.float32)

    y2 = jax.block_until_ready(encoder_forward(x2, weight2.T, bias2))
    y2_ref = x2 @ weight2.T + bias2
    assert y2.shape == (batch2, latent_dim2)
    assert jnp.allclose(y2, y2_ref, atol=1e-4, rtol=1e-4)

    print("KERNEL_OK")
</pallas_src>

<mosaic_0001>
module attributes {stable_mosaic.version = 11 : i64} {
  func.func @_linear_kernel(%arg0: i32, %arg1: i32, %arg2: memref<8x256xf32, #tpu.memory_space<vmem>>, %arg3: memref<256x128xf32, #tpu.memory_space<vmem>>, %arg4: memref<1x128xf32, #tpu.memory_space<vmem>>, %arg5: memref<8x128xf32, #tpu.memory_space<vmem>>) attributes {dimension_semantics = [#tpu.dimension_semantics<parallel>, #tpu.dimension_semantics<parallel>], iteration_bounds = array<i64: 1, 1>, scalar_prefetch = 0 : i64, scratch_operands = 0 : i64, tpu.core_type = #tpu.core_type<tc>, window_params = [{transform_indices = @transform_0, window_bounds = array<i64: 8, 256>}, {transform_indices = @transform_1, window_bounds = array<i64: 256, 128>}, {transform_indices = @transform_2, window_bounds = array<i64: 1, 128>}, {transform_indices = @transform_3, window_bounds = array<i64: 8, 128>}]} {
    %c0 = arith.constant 0 : index
    %c0_0 = arith.constant 0 : index
    %0 = vector.load %arg2[%c0, %c0_0] : memref<8x256xf32, #tpu.memory_space<vmem>>, vector<8x256xf32>
    %c0_1 = arith.constant 0 : index
    %c0_2 = arith.constant 0 : index
    %1 = vector.load %arg3[%c0_1, %c0_2] : memref<256x128xf32, #tpu.memory_space<vmem>>, vector<256x128xf32>
    %cst = arith.constant dense<0.000000e+00> : vector<8x128xf32>
    %2 = tpu.matmul %0, %1, %cst {dimension_numbers = #tpu.dot_dimension_numbers<[1], [0], [0], [1], [0, 0, 1, 1], [], []>} : vector<8x256xf32>, vector<256x128xf32>, vector<8x128xf32> -> vector<8x128xf32>
    %c0_3 = arith.constant 0 : index
    %c0_4 = arith.constant 0 : index
    %3 = vector.load %arg4[%c0_3, %c0_4] : memref<1x128xf32, #tpu.memory_space<vmem>>, vector<1x128xf32>
    %4 = vector.broadcast %3 : vector<1x128xf32> to vector<8x128xf32>
    %5 = arith.addf %2, %4 : vector<8x128xf32>
    %c0_5 = arith.constant 0 : index
    %c0_6 = arith.constant 0 : index
    %6 = vector.load %arg5[%c0_5, %c0_6] : memref<8x128xf32, #tpu.memory_space<vmem>>, vector<8x128xf32>
    tpu.vector_store %arg5[%c0_5, %c0_6], %5 {strides = array<i32>} : memref<8x128xf32, #tpu.memory_space<vmem>>, vector<8x128xf32>,
    return
  }
  func.func @transform_0(%arg0: i32, %arg1: i32) -> (i32, i32) {
    %c0_i32 = arith.constant 0 : i32
    %c0_i32_0 = arith.constant 0 : i32
    return %arg1, %c0_i32 : i32, i32
  }
  func.func @transform_1(%arg0: i32, %arg1: i32) -> (i32, i32) {
    %c0_i32 = arith.constant 0 : i32
    %c0_i32_0 = arith.constant 0 : i32
    return %c0_i32, %arg0 : i32, i32
  }
  func.func @transform_2(%arg0: i32, %arg1: i32) -> (i32, i32) {
    %c0_i32 = arith.constant 0 : i32
    %c0_i32_0 = arith.constant 0 : i32
    return %c0_i32, %arg0 : i32, i32
  }
  func.func @transform_3(%arg0: i32, %arg1: i32) -> (i32, i32) {
    %c0_i32 = arith.constant 0 : i32
    return %arg1, %arg0 : i32, i32
  }
}

</mosaic_0001>

<llo_original>
// kernel: tpu_custom_call.1
$region0: #{tpu_custom_call.1}
  #allocation0 [shape = 'u32[]', space=smem, size = 0x4, offset = 0x4, fixed_abs, tag = 'smem constant byte address 0x4 - core index']
  #allocation1 [shape = 'u32[144,128]{1,0:T(1,128)}', space=vmem, size = 0x12000, scoped, tag = 'internal scratch']
  %s0 = inlined_call_operand.hbm [shape: f32[6,256], index: 0, kind: input, shape index: {}]
  %s1 = inlined_call_operand.hbm [shape: f32[256,128], index: 1, kind: input, shape index: {}]
  %s2 = inlined_call_operand.vmem [shape: f32[1,128], index: 2, kind: input, shape index: {}]
  %s3 = inlined_call_operand.hbm [shape: f32[6,128], index: 3, kind: output, shape index: {}]
  %s4 = sld [smem:[#allocation0]]
  $region30: #{tpu_custom_call.1} parent=0
    _
  %s6 = ssub.s32 1, %s4
  %s7 = scalar_select 0, %s6, %s4
  $region1: #{tpu_custom_call.1} parent=0
    #allocation2 [shape = 'u8[8192]{0}', space=vmem, size = 0x2000, scoped, tag = 'input window, operand 0, single buffered']
    #allocation3 [shape = 's32[1]{0}', space=sflag, size = 0x4, scoped, tag = 'scoped memory for tpu_custom_call.1']
    #allocation4 [shape = 's32[1]{0}', space=sflag, size = 0x4, scoped, tag = 'scoped memory for tpu_custom_call.1']
    #allocation5 [shape = 'u8[131072]{0}', space=vmem, size = 0x20000, scoped, tag = 'input window, operand 1, single buffered']
    #allocation6 [shape = 's32[1]{0}', space=sflag, size = 0x4, scoped, tag = 'scoped memory for tpu_custom_call.1']
    #allocation7 [shape = 'u8[4096]{0}', space=vmem, size = 0x1000, scoped, tag = 'output window, operand 0, single buffered']
    %8 = vsyncpa [#allocation3], 0
    %9 = vsyncpa [#allocation6], 0
    %10 = vsyncpa [#allocation4], 0
    // Predicated region
    $region2: #{tpu_custom_call.1} parent=1 // pred_check
      _
    $region3: #{tpu_custom_call.1} parent=1 // pred_check_branch
      %12 = sbr.rel (0) target = $region5
    $region4: #{tpu_custom_call.1} parent=1 // pred_region
      %s14 = ssub.s32 256, 256
      %15 = vsyncadd [#allocation3], %s14
      %s17 = sshll.u32 [#allocation2], 4
      %s18 = int_to_ptr.vmem [resolvable:$true] %s17
      %20 = dma.hbm_to_vmem [thread:$0]  %s0, 256, %s18, [#allocation3]
    $region5: #{tpu_custom_call.1} parent=1 // pred_fallthru
      _
    // Predicated region
    $region6: #{tpu_custom_call.1} parent=1 // pred_check
      _
    $region7: #{tpu_custom_call.1} parent=1 // pred_check_branch
      %22 = sbr.rel (0) target = $region9
    $region8: #{tpu_custom_call.1} parent=1 // pred_region
      %s24 = ssub.s32 4096, 4096
      %25 = vsyncadd [#allocation6], %s24
      %s26 = sshll.u32 [#allocation5], 4
      %s27 = int_to_ptr.vmem [resolvable:$true] %s26
      %32 = dma.hbm_to_vmem [thread:$0]  %s1, 4096, %s27, [#allocation6], 128, 128, 8
    $region9: #{tpu_custom_call.1} parent=1 // pred_fallthru
      _
    // Predicated region
    $region10: #{tpu_custom_call.1} parent=1 // pred_check
      _
    $region11: #{tpu_custom_call.1} parent=1 // pred_check_branch
      %34 = sbr.rel (0) target = $region13
    $region12: #{tpu_custom_call.1} parent=1 // pred_region
      _
    $region13: #{tpu_custom_call.1} parent=1 // pred_fallthru
      _
    // Predicated region
    $region14: #{tpu_custom_call.1} parent=1 // pred_check
      _
    $region15: #{tpu_custom_call.1} parent=1 // pred_check_branch
      %36 = sbr.rel (0) target = $region17
    $region16: #{tpu_custom_call.1} parent=1 // pred_region
      %37 = dma.done [#allocation3], 256
    $region17: #{tpu_custom_call.1} parent=1 // pred_fallthru
      _
    // Predicated region
    $region18: #{tpu_custom_call.1} parent=1 // pred_check
      _
    $region19: #{tpu_custom_call.1} parent=1 // pred_check_branch
      %39 = sbr.rel (0) target = $region21
    $region20: #{tpu_custom_call.1} parent=1 // pred_region
      %40 = dma.done [#allocation6], 4096
    $region21: #{tpu_custom_call.1} parent=1 // pred_fallthru
      _
    %v41 = vld [vmem:[#allocation2] sm:$0xff]
    %v42 = vld [vmem:[#allocation2 + $0x8] sm:$0xff]
    %v43 = vld [vmem:[#allocation5] sm:$0xff]
    %v44 = vld [vmem:[#allocation5 + $0x8] sm:$0xff]
    %v45 = vld [vmem:[#allocation5 + $0x10] sm:$0xff]
    %v46 = vld [vmem:[#allocation5 + $0x18] sm:$0xff]
    %v47 = vld [vmem:[#allocation5 + $0x20] sm:$0xff]
    %v48 = vld [vmem:[#allocation5 + $0x28] sm:$0xff]
    %v49 = vld [vmem:[#allocation5 + $0x30] sm:$0xff]
    %v50 = vld [vmem:[#allocation5 + $0x38] sm:$0xff]
    %v51 = vld [vmem:[#allocation5 + $0x40] sm:$0xff]
    %v52 = vld [vmem:[#allocation5 + $0x48] sm:$0xff]
    %v53 = vld [vmem:[#allocation5 + $0x50] sm:$0xff]
    %v54 = vld [vmem:[#allocation5 + $0x58] sm:$0xff]
    %v55 = vld [vmem:[#allocation5 + $0x60] sm:$0xff]
    %v56 = vld [vmem:[#allocation5 + $0x68] sm:$0xff]
    %v57 = vld [vmem:[#allocation5 + $0x70] sm:$0xff]
    %v58 = vld [vmem:[#allocation5 + $0x78] sm:$0xff]
    %v59 = vld [vmem:[#allocation5 + $0x80] sm:$0xff]
    %v60 = vld [vmem:[#allocation5 + $0x88] sm:$0xff]
    %v61 = vld [vmem:[#allocation5 + $0x90] sm:$0xff]
    %v62 = vld [vmem:[#allocation5 + $0x98] sm:$0xff]
    %v63 = vld [vmem:[#allocation5 + $0xa0] sm:$0xff]
    %v64 = vld [vmem:[#allocation5 + $0xa8] sm:$0xff]
    %v65 = vld [vmem:[#allocation5 + $0xb0] sm:$0xff]
    %v66 = vld [vmem:[#allocation5 + $0xb8] sm:$0xff]
    %v67 = vld [vmem:[#allocation5 + $0xc0] sm:$0xff]
    %v68 = vld [vmem:[#allocation5 + $0xc8] sm:$0xff]
    %v69 = vld [vmem:[#allocation5 + $0xd0] sm:$0xff]
    %v70 = vld [vmem:[#allocation5 + $0xd8] sm:$0xff]
    %v71 = vld [vmem:[#allocation5 + $0xe0] sm:$0xff]
    %v72 = vld [vmem:[#allocation5 + $0xe8] sm:$0xff]
    %v73 = vld [vmem:[#allocation5 + $0xf0] sm:$0xff]
    %v74 = vld [vmem:[#allocation5 + $0xf8] sm:$0xff]
    %v75 = vld [vmem:[%s2] sm:$0x1]
    %v77 = vlaneseq
    %v78 = vshrl.u32 %v77, 7
    %v79 = vsub.s32 0, %v78
    %v80 = vrot.slane %v75, %v79
    %82 = vmatprep.subr.mxu0 0.0
    %83 = vmatpush1.msra.mxu0 %v58
    %84 = vmatprep.subr.mxu0 0.0
    %85 = vmatpush1.msra.mxu0 %v57
    %86 = vmatprep.subr.mxu0 0.0
    %87 = vmatpush1.msra.mxu0 %v56
    %88 = vmatprep.subr.mxu0 0.0
    %89 = vmatpush1.msra.mxu0 %v55
    %90 = vmatprep.subr.mxu0 0.0
    %91 = vmatpush1.msra.mxu0 %v54
    %92 = vmatprep.subr.mxu0 0.0
    %93 = vmatpush1.msra.mxu0 %v53
    %94 = vmatprep.subr.mxu0 0.0
    %95 = vmatpush1.msra.mxu0 %v52
    %96 = vmatprep.subr.mxu0 0.0
    %97 = vmatpush1.msra.mxu0 %v51
    %98 = vmatprep.subr.mxu0 0.0
    %99 = vmatpush1.msra.mxu0 %v50
    %100 = vmatprep.subr.mxu0 0.0
    %101 = vmatpush1.msra.mxu0 %v49
    %102 = vmatprep.subr.mxu0 0.0
    %103 = vmatpush1.msra.mxu0 %v48
    %104 = vmatprep.subr.mxu0 0.0
    %105 = vmatpush1.msra.mxu0 %v47
    %106 = vmatprep.subr.mxu0 0.0
    %107 = vmatpush1.msra.mxu0 %v46
    %108 = vmatprep.subr.mxu0 0.0
    %109 = vmatpush1.msra.mxu0 %v45
    %110 = vmatprep.subr.mxu0 0.0
    %111 = vmatpush1.msra.mxu0 %v44
    %112 = vmatprep.subr.mxu0 0.0
    %113 = vmatpush1.msra.mxu0 %v43
    %114 = vmatprep.subr.mxu0 0.0
    %115 = vmatpush2.msra.mxu0 %v74
    %116 = vmatprep.subr.mxu0 0.0
    %117 = vmatpush2.msra.mxu0 %v73
    %118 = vmatprep.subr.mxu0 0.0
    %119 = vmatpush2.msra.mxu0 %v72
    %120 = vmatprep.subr.mxu0 0.0
    %121 = vmatpush2.msra.mxu0 %v71
    %122 = vmatprep.subr.mxu0 0.0
    %123 = vmatpush2.msra.mxu0 %v70
    %124 = vmatprep.subr.mxu0 0.0
    %125 = vmatpush2.msra.mxu0 %v69
    %126 = vmatprep.subr.mxu0 0.0
    %127 = vmatpush2.msra.mxu0 %v68
    %128 = vmatprep.subr.mxu0 0.0
    %129 = vmatpush2.msra.mxu0 %v67
    %130 = vmatprep.subr.mxu0 0.0
    %131 = vmatpush2.msra.mxu0 %v66
    %132 = vmatprep.subr.mxu0 0.0
    %133 = vmatpush2.msra.mxu0 %v65
    %134 = vmatprep.subr.mxu0 0.0
    %135 = vmatpush2.msra.mxu0 %v64
    %136 = vmatprep.subr.mxu0 0.0
    %137 = vmatpush2.msra.mxu0 %v63
    %138 = vmatprep.subr.mxu0 0.0
    %139 = vmatpush2.msra.mxu0 %v62
    %140 = vmatprep.subr.mxu0 0.0
    %141 = vmatpush2.msra.mxu0 %v61
    %142 = vmatprep.subr.mxu0 0.0
    %143 = vmatpush2.msra.mxu0 %v60
    %144 = vmatprep.subr.mxu0 0.0
    %145 = vmatpush2.msra.mxu0 %v59
    %146 = vmatprep.mubr.f32.mxu0 %v42
    %147 = vmatmul.mubr.f32.gmra.mxu0 %v41
    %v148 = vpop.f32.mrf.mxu0
    %v149 = vadd.f32 %v80, %v148
    %v150 = vpop.f32.mrf.mxu0
    %151 = vdwg.mxu0
    %152 = vst [vmem:[#allocation7] sm:$0xff] %v149
    // Predicated region
    $region22: #{tpu_custom_call.1} parent=1 // pred_check
      _
    $region23: #{tpu_custom_call.1} parent=1 // pred_check_branch
      %154 = sbr.rel (0) target = $region25
    $region24: #{tpu_custom_call.1} parent=1 // pred_region
      %s156 = ssub.s32 128, 128
      %157 = vsyncadd [#allocation4], %s156
      %s159 = sshll.u32 [#allocation7], 4
      %s160 = int_to_ptr.vmem [resolvable:$true] %s159
      %162 = dma.vmem_to_hbm [thread:$0]  %s160, 128, %s3, [#allocation4]
    $region25: #{tpu_custom_call.1} parent=1 // pred_fallthru
      _
    // Predicated region
    $region26: #{tpu_custom_call.1} parent=1 // pred_check
      _
    $region27: #{tpu_custom_call.1} parent=1 // pred_check_branch
      %164 = sbr.rel (0) target = $region29
    $region28: #{tpu_custom_call.1} parent=1 // pred_region
      %165 = dma.done [#allocation4], 128
    $region29: #{tpu_custom_call.1} parent=1 // pred_fallthru
      _
    %166 = vsyncpa [#allocation3], 1
    %167 = vsyncpa [#allocation6], 1
    %168 = vsyncpa [#allocation4], 1

</llo_original>
